<compile_context>
chip_gen: v6e
topology: v6e:2x2x1
jax: 0.10.0
libtpu: 0.0.40
codegen_flags: <defaults>
</compile_context>

<pallas_src>
import math

import jax
import jax.numpy as jnp
from jax.experimental import pallas as pl
from jax.experimental.pallas import tpu as pltpu

_LANES = 128
_MAX_BLOCK_COLS = 16 * 1024                  # lane-dim cap per block (multiple of 128)
_DEFAULT_BLOCK_BYTES = 2 * 1024 * 1024       # safe on v5e (16 MiB scoped VMEM), good on v6e
_V7X_BLOCK_BYTES = 4 * 1024 * 1024           # v7x: ~3.2 TB/s HBM, 32 MiB scoped VMEM default
_SMALL_WHOLE_ARRAY_BYTES = 2 * 1024 * 1024   # below this: single whole-array block, no reshape


def _round_up(a: int, b: int) -> int:
    return ((a + b - 1) // b) * b


def _sublane(itemsize: int) -> int:
    # dtype sublane tile: 8 (f32), 16 (bf16/f16), 32 (int8/fp8)
    return max(8, 32 // max(int(itemsize), 1))


def _target_block_bytes() -> int:
    """Generation-aware per-block byte budget (best effort; safe fallback)."""
    try:
        info = pltpu.get_tpu_info()
        vmem = getattr(info, "vmem_capacity_bytes", None)
        if vmem is not None and vmem <= 96 * 1024 * 1024:
            # v7x-class core (64 MiB VMEM/TC, ~3.2 TB/s HBM): larger blocks keep the
            # ~0.35us per-grid-step overhead hidden. 2 bufs x (in+out) x 4 MiB = 16 MiB
            # fits the 32 MiB scoped-VMEM default with headroom.
            return _V7X_BLOCK_BYTES
    except Exception:
        pass
    return _DEFAULT_BLOCK_BYTES


def _pick_block_rows(rows, cols_padded, itemsize, target_bytes, other_blocks=1):
    """Rows per block: ~target_bytes per block, sublane-aligned; keep >= 4 grid blocks
    total when the array is big enough (megacore sharding + per-core pipelining)."""
    sub = _sublane(itemsize)
    row_bytes = max(cols_padded * itemsize, 1)
    br = max(sub, (target_bytes // row_bytes) // sub * sub)
    br = min(br, _round_up(rows, sub))
    if other_blocks * pl.cdiv(rows, br) < 4 and rows > 4 * sub:
        br = max(sub, _round_up(pl.cdiv(rows, 4), sub))
    return br


def _leaky_hardtanh_kernel(params_ref, x_ref, o_ref):
    # params_ref lives in SMEM: [min_val, max_val, slope] as f32. Reading them at run
    # time (instead of baking Python floats into the trace) means new parameter values
    # never force a Mosaic recompile.
    x = x_ref[...]
    lo = params_ref[0].astype(x.dtype)
    hi = params_ref[1].astype(x.dtype)
    slope = params_ref[2].astype(x.dtype)
    y = jnp.clip(x, lo, hi)
    o_ref[...] = y + slope * (x - y)


def leaky_hardtanh(x, min_val=-1.0, max_val=1.0, slope=0.01):
    """Elementwise LeakyHardtanh matching the PyTorch reference semantics."""
    assert float(max_val) > float(min_val), "max_val must be larger than min_val"
    orig_shape = x.shape
    dtype = x.dtype
    if x.size == 0:
        return x

    # Runtime scalar parameters -> SMEM (no recompile when they change).
    params = jnp.asarray([min_val, max_val, slope], dtype=jnp.float32)
    smem_spec = pl.BlockSpec(memory_space=pltpu.MemorySpace.SMEM)
    vmem_spec = pl.BlockSpec(memory_space=pltpu.MemorySpace.VMEM)

    itemsize = jnp.dtype(dtype).itemsize
    sub = _sublane(itemsize)
    cost = pl.CostEstimate(flops=4 * x.size, transcendentals=0,
                           bytes_accessed=2 * x.size * itemsize)

    # Present a >=2-D view. For >=2-D inputs this is the array itself (no copy).
    if x.ndim == 0:
        xv = x.reshape(1, 1)
    elif x.ndim == 1:
        n = x.shape[0]
        xv = x.reshape(-1, _LANES) if n % _LANES == 0 else x.reshape(1, n)
    else:
        xv = x

    lead = xv.shape[:-2]
    d2, d1 = xv.shape[-2], xv.shape[-1]
    lead_n = math.prod(lead) if lead else 1
    padded_bytes = lead_n * _round_up(d2, sub) * _round_up(d1, _LANES) * itemsize

    # ---- Small inputs: one whole-array block on the ORIGINAL shape. ----
    # No flatten / pad / relayout copies; the "last two block dims == full array dims"
    # exception to the (8,128) rule makes unaligned shapes (e.g. (2,4,16,16)) legal as-is.
    if padded_bytes <= _SMALL_WHOLE_ARRAY_BYTES:
        out = pl.pallas_call(
            _leaky_hardtanh_kernel,
            out_shape=jax.ShapeDtypeStruct(xv.shape, dtype),
            in_specs=[smem_spec, vmem_spec],
            out_specs=vmem_spec,
            cost_estimate=cost,
        )(params, xv)
        return out.reshape(orig_shape)

    # ---- Large inputs: collapse leading dims (last dim kept intact) and tile. ----
    # Layout-free when the last dim is a multiple of 128 (or the second-to-last dim is
    # sublane-aligned); unlike the old flatten+pad path it never adds a pad copy and at
    # worst costs a single relayout for odd shapes.
    target = _target_block_bytes()
    x2d = xv.reshape(-1, d1)
    rows, cols = x2d.shape
    bc = cols if cols <= _MAX_BLOCK_COLS else _MAX_BLOCK_COLS   # full dim or 128-multiple
    col_blocks = pl.cdiv(cols, bc)
    br = _pick_block_rows(rows, _round_up(bc, _LANES), itemsize, target,
                          other_blocks=col_blocks)
    grid = (pl.cdiv(rows, br), col_blocks)

    out2d = pl.pallas_call(
        _leaky_hardtanh_kernel,
        out_shape=jax.ShapeDtypeStruct((rows, cols), dtype),
        grid_spec=pltpu.PrefetchScalarGridSpec(
            num_scalar_prefetch=0,
            grid=grid,
            in_specs=[smem_spec,
                      pl.BlockSpec((br, bc), lambda i, j: (i, j))],
            out_specs=pl.BlockSpec((br, bc), lambda i, j: (i, j)),
        ),
        compiler_params=pltpu.CompilerParams(
            dimension_semantics=("parallel", "parallel")),
        cost_estimate=cost,
    )(params, x2d)
    return out2d.reshape(orig_shape)


class LeakyHardtanh:
    """Functional analogue of the PyTorch nn.Module."""

    def __init__(self, min_val: float = -1.0, max_val: float = 1.0, slope: float = 0.01):
        assert max_val > min_val, "max_val must be larger than min_val"
        self.min_val, self.max_val, self.slope = min_val, max_val, slope

    def __call__(self, x):
        return leaky_hardtanh(x, self.min_val, self.max_val, self.slope)


if __name__ == "__main__":
    key = jax.random.PRNGKey(0)

    # Primary (module-spec) example: small NCHW-like input, values outside [-1, 1] too.
    x = jax.random.normal(key, (2, 4, 16, 16), dtype=jnp.float32) * 2.0
    m = LeakyHardtanh(-1.0, 1.0, 0.01)
    out = jax.block_until_ready(m(x))
    y = jnp.clip(x, -1.0, 1.0)
    ref = y + 0.01 * (x - y)
    assert out.shape == x.shape and out.dtype == x.dtype
    assert jnp.allclose(out, ref, atol=1e-6, rtol=1e-6)

    # Exercise the tiled (lane-aligned, multi-block grid) path.
    x2 = jax.random.normal(jax.random.PRNGKey(0), (2048, 512), dtype=jnp.float32) * 3.0
    out2 = jax.block_until_ready(leaky_hardtanh(x2, -2.0, 2.0, 0.05))
    y2 = jnp.clip(x2, -2.0, 2.0)
    assert jnp.allclose(out2, y2 + 0.05 * (x2 - y2), atol=1e-6, rtol=1e-6)

    # Exercise a ragged 1-D shape (single whole-array block, no pad).
    x3 = jax.random.normal(jax.random.PRNGKey(0), (257,), dtype=jnp.float32) * 2.0
    out3 = jax.block_until_ready(leaky_hardtanh(x3))
    y3 = jnp.clip(x3, -1.0, 1.0)
    assert jnp.allclose(out3, y3 + 0.01 * (x3 - y3), atol=1e-6, rtol=1e-6)

    print("KERNEL_OK")
</pallas_src>

<mosaic_0001>
module attributes {stable_mosaic.version = 11 : i64} {
  func.func @_leaky_hardtanh_kernel(%arg0: memref<3xf32, #tpu.memory_space<smem>>, %arg1: memref<2x4x16x16xf32, #tpu.memory_space<vmem>>, %arg2: memref<2x4x16x16xf32, #tpu.memory_space<vmem>>) attributes {dimension_semantics = [], scalar_prefetch = 0 : i64, scratch_operands = 0 : i64, tpu.core_type = #tpu.core_type<tc>} {
    %c0 = arith.constant 0 : index
    %c0_0 = arith.constant 0 : index
    %c0_1 = arith.constant 0 : index
    %c0_2 = arith.constant 0 : index
    %0 = vector.load %arg1[%c0, %c0_0, %c0_1, %c0_2] : memref<2x4x16x16xf32, #tpu.memory_space<vmem>>, vector<2x4x16x16xf32>
    %c0_3 = arith.constant 0 : index
    %1 = memref.load %arg0[%c0_3] : memref<3xf32, #tpu.memory_space<smem>>
    %c1 = arith.constant 1 : index
    %2 = memref.load %arg0[%c1] : memref<3xf32, #tpu.memory_space<smem>>
    %c2 = arith.constant 2 : index
    %3 = memref.load %arg0[%c2] : memref<3xf32, #tpu.memory_space<smem>>
    %4 = vector.broadcast %1 : f32 to vector<2x4x16x16xf32>
    %5 = arith.maximumf %4, %0 : vector<2x4x16x16xf32>
    %6 = vector.broadcast %2 : f32 to vector<2x4x16x16xf32>
    %7 = arith.minimumf %6, %5 : vector<2x4x16x16xf32>
    %8 = arith.subf %0, %7 : vector<2x4x16x16xf32>
    %9 = vector.broadcast %3 : f32 to vector<2x4x16x16xf32>
    %10 = arith.mulf %9, %8 : vector<2x4x16x16xf32>
    %11 = arith.addf %7, %10 : vector<2x4x16x16xf32>
    %c0_4 = arith.constant 0 : index
    %c0_5 = arith.constant 0 : index
    %c0_6 = arith.constant 0 : index
    %c0_7 = arith.constant 0 : index
    %12 = vector.load %arg2[%c0_4, %c0_5, %c0_6, %c0_7] : memref<2x4x16x16xf32, #tpu.memory_space<vmem>>, vector<2x4x16x16xf32>
    tpu.vector_store %arg2[%c0_4, %c0_5, %c0_6, %c0_7], %11 {strides = array<i32>} : memref<2x4x16x16xf32, #tpu.memory_space<vmem>>, vector<2x4x16x16xf32>,
    return
  }
}

</mosaic_0001>

<llo_original>
// kernel: tpu_custom_call.1
$region0: #{tpu_custom_call.1}
  #allocation0 [shape = 'u32[]', space=smem, size = 0x4, offset = 0x4, fixed_abs, tag = 'smem constant byte address 0x4 - core index']
  #allocation1 [shape = 'u32[144,128]{1,0:T(1,128)}', space=vmem, size = 0x12000, scoped, tag = 'internal scratch']
  %s0 = inlined_call_operand.hbm [shape: f32[3], index: 0, kind: input, shape index: {}]
  %s1 = inlined_call_operand.hbm [shape: f32[2,4,16,16], index: 1, kind: input, shape index: {}]
  %s2 = inlined_call_operand.hbm [shape: f32[2,4,16,16], index: 2, kind: output, shape index: {}]
  %s3 = sld [smem:[#allocation0]]
  $region26: #{tpu_custom_call.1} parent=0
    _
  %s5 = ssub.s32 1, %s3
  %s6 = scalar_select 0, %s5, %s3
  $region1: #{tpu_custom_call.1} parent=0
    #allocation2 [shape = 'u8[512]{0}', space=smem, size = 0x200, scoped, tag = 'input window, operand 0, single buffered']
    #allocation3 [shape = 's32[1]{0}', space=sflag, size = 0x4, scoped, tag = 'scoped memory for tpu_custom_call.1']
    #allocation4 [shape = 's32[1]{0}', space=sflag, size = 0x4, scoped, tag = 'scoped memory for tpu_custom_call.1']
    #allocation5 [shape = 's32[1]{0}', space=sflag, size = 0x4, scoped, tag = 'scoped memory for tpu_custom_call.1']
    #allocation6 [shape = 'u8[65536]{0}', space=vmem, size = 0x10000, scoped, tag = 'input window, operand 1, single buffered']
    #allocation7 [shape = 'u8[65536]{0}', space=vmem, size = 0x10000, scoped, tag = 'output window, operand 0, single buffered']
    %7 = vsyncpa [#allocation5], 0
    %8 = vsyncpa [#allocation3], 0
    %9 = vsyncpa [#allocation4], 0
    // Predicated region
    $region2: #{tpu_custom_call.1} parent=1 // pred_check
      _
    $region3: #{tpu_custom_call.1} parent=1 // pred_check_branch
      %11 = sbr.rel (0) target = $region5
    $region4: #{tpu_custom_call.1} parent=1 // pred_region
      %s13 = ssub.s32 16, 16
      %14 = vsyncadd [#allocation5], %s13
      %17 = dma.hbm_to_smem %s0, 16, [#allocation2], [#allocation5]
    $region5: #{tpu_custom_call.1} parent=1 // pred_fallthru
      _
    // Predicated region
    $region6: #{tpu_custom_call.1} parent=1 // pred_check
      _
    $region7: #{tpu_custom_call.1} parent=1 // pred_check_branch
      %19 = sbr.rel (0) target = $region9
    $region8: #{tpu_custom_call.1} parent=1 // pred_region
      %s21 = ssub.s32 2048, 2048
      %22 = vsyncadd [#allocation3], %s21
      %s23 = sshll.u32 [#allocation6], 4
      %s24 = int_to_ptr.vmem [resolvable:$true] %s23
      %29 = dma.hbm_to_vmem [thread:$0]  %s1, 2048, %s24, [#allocation3], 128, 128, 8
    $region9: #{tpu_custom_call.1} parent=1 // pred_fallthru
      _
    // Predicated region
    $region10: #{tpu_custom_call.1} parent=1 // pred_check
      _
    $region11: #{tpu_custom_call.1} parent=1 // pred_check_branch
      %31 = sbr.rel (0) target = $region13
    $region12: #{tpu_custom_call.1} parent=1 // pred_region
      %32 = dma.done [#allocation5], 16
    $region13: #{tpu_custom_call.1} parent=1 // pred_fallthru
      _
    // Predicated region
    $region14: #{tpu_custom_call.1} parent=1 // pred_check
      _
    $region15: #{tpu_custom_call.1} parent=1 // pred_check_branch
      %34 = sbr.rel (0) target = $region17
    $region16: #{tpu_custom_call.1} parent=1 // pred_region
      %35 = dma.done [#allocation3], 2048
    $region17: #{tpu_custom_call.1} parent=1 // pred_fallthru
      _
    %36 = sfence
    %v37 = vld [vmem:[#allocation6] sm:$0xff]
    %v38 = vld [vmem:[#allocation6 + $0x8] sm:$0xff]
    %v39 = vld [vmem:[#allocation6 + $0x10] sm:$0xff]
    %v40 = vld [vmem:[#allocation6 + $0x18] sm:$0xff]
    %v41 = vld [vmem:[#allocation6 + $0x20] sm:$0xff]
    %v42 = vld [vmem:[#allocation6 + $0x28] sm:$0xff]
    %v43 = vld [vmem:[#allocation6 + $0x30] sm:$0xff]
    %v44 = vld [vmem:[#allocation6 + $0x38] sm:$0xff]
    %v45 = vld [vmem:[#allocation6 + $0x40] sm:$0xff]
    %v46 = vld [vmem:[#allocation6 + $0x48] sm:$0xff]
    %v47 = vld [vmem:[#allocation6 + $0x50] sm:$0xff]
    %v48 = vld [vmem:[#allocation6 + $0x58] sm:$0xff]
    %v49 = vld [vmem:[#allocation6 + $0x60] sm:$0xff]
    %v50 = vld [vmem:[#allocation6 + $0x68] sm:$0xff]
    %v51 = vld [vmem:[#allocation6 + $0x70] sm:$0xff]
    %v52 = vld [vmem:[#allocation6 + $0x78] sm:$0xff]
    %s53 = sld [smem:[#allocation2]]
    %s54 = sld [smem:[#allocation2 + $0x1]]
    %s55 = sld [smem:[#allocation2 + $0x2]]
    %v56 = vstv %s53
    %v57 = vmax.f32 %v56, %v37
    %v58 = vmax.f32 %v56, %v38
    %v59 = vmax.f32 %v56, %v39
    %v60 = vmax.f32 %v56, %v40
    %v61 = vmax.f32 %v56, %v41
    %v62 = vmax.f32 %v56, %v42
    %v63 = vmax.f32 %v56, %v43
    %v64 = vmax.f32 %v56, %v44
    %v65 = vmax.f32 %v56, %v45
    %v66 = vmax.f32 %v56, %v46
    %v67 = vmax.f32 %v56, %v47
    %v68 = vmax.f32 %v56, %v48
    %v69 = vmax.f32 %v56, %v49
    %v70 = vmax.f32 %v56, %v50
    %v71 = vmax.f32 %v56, %v51
    %v72 = vmax.f32 %v56, %v52
    %v73 = vstv %s54
    %v74 = vmin.f32 %v73, %v57
    %v75 = vmin.f32 %v73, %v58
    %v76 = vmin.f32 %v73, %v59
    %v77 = vmin.f32 %v73, %v60
    %v78 = vmin.f32 %v73, %v61
    %v79 = vmin.f32 %v73, %v62
    %v80 = vmin.f32 %v73, %v63
    %v81 = vmin.f32 %v73, %v64
    %v82 = vmin.f32 %v73, %v65
    %v83 = vmin.f32 %v73, %v66
    %v84 = vmin.f32 %v73, %v67
    %v85 = vmin.f32 %v73, %v68
    %v86 = vmin.f32 %v73, %v69
    %v87 = vmin.f32 %v73, %v70
    %v88 = vmin.f32 %v73, %v71
    %v89 = vmin.f32 %v73, %v72
    %v90 = vsub.f32 %v37, %v74
    %v91 = vsub.f32 %v38, %v75
    %v92 = vsub.f32 %v39, %v76
    %v93 = vsub.f32 %v40, %v77
    %v94 = vsub.f32 %v41, %v78
    %v95 = vsub.f32 %v42, %v79
    %v96 = vsub.f32 %v43, %v80
    %v97 = vsub.f32 %v44, %v81
    %v98 = vsub.f32 %v45, %v82
    %v99 = vsub.f32 %v46, %v83
    %v100 = vsub.f32 %v47, %v84
    %v101 = vsub.f32 %v48, %v85
    %v102 = vsub.f32 %v49, %v86
    %v103 = vsub.f32 %v50, %v87
    %v104 = vsub.f32 %v51, %v88
    %v105 = vsub.f32 %v52, %v89
    %v106 = vstv %s55
    %v107 = vmul.f32 %v106, %v90
    %v108 = vmul.f32 %v106, %v91
    %v109 = vmul.f32 %v106, %v92
    %v110 = vmul.f32 %v106, %v93
    %v111 = vmul.f32 %v106, %v94
    %v112 = vmul.f32 %v106, %v95
    %v113 = vmul.f32 %v106, %v96
    %v114 = vmul.f32 %v106, %v97
    %v115 = vmul.f32 %v106, %v98
    %v116 = vmul.f32 %v106, %v99
    %v117 = vmul.f32 %v106, %v100
    %v118 = vmul.f32 %v106, %v101
    %v119 = vmul.f32 %v106, %v102
    %v120 = vmul.f32 %v106, %v103
    %v121 = vmul.f32 %v106, %v104
    %v122 = vmul.f32 %v106, %v105
    %v123 = vadd.f32 %v74, %v107
    %v124 = vadd.f32 %v75, %v108
    %v125 = vadd.f32 %v76, %v109
    %v126 = vadd.f32 %v77, %v110
    %v127 = vadd.f32 %v78, %v111
    %v128 = vadd.f32 %v79, %v112
    %v129 = vadd.f32 %v80, %v113
    %v130 = vadd.f32 %v81, %v114
    %v131 = vadd.f32 %v82, %v115
    %v132 = vadd.f32 %v83, %v116
    %v133 = vadd.f32 %v84, %v117
    %v134 = vadd.f32 %v85, %v118
    %v135 = vadd.f32 %v86, %v119
    %v136 = vadd.f32 %v87, %v120
    %v137 = vadd.f32 %v88, %v121
    %v138 = vadd.f32 %v89, %v122
    %vm139 = vcmask 130048
    %140 = vst.msk [vmem:[#allocation7] sm:$0xff] %vm139, %v123
    %141 = vst.msk [vmem:[#allocation7 + $0x8] sm:$0xff] %vm139, %v124
    %142 = vst.msk [vmem:[#allocation7 + $0x10] sm:$0xff] %vm139, %v125
    %143 = vst.msk [vmem:[#allocation7 + $0x18] sm:$0xff] %vm139, %v126
    %144 = vst.msk [vmem:[#allocation7 + $0x20] sm:$0xff] %vm139, %v127
    %145 = vst.msk [vmem:[#allocation7 + $0x28] sm:$0xff] %vm139, %v128
    %146 = vst.msk [vmem:[#allocation7 + $0x30] sm:$0xff] %vm139, %v129
    %147 = vst.msk [vmem:[#allocation7 + $0x38] sm:$0xff] %vm139, %v130
    %148 = vst.msk [vmem:[#allocation7 + $0x40] sm:$0xff] %vm139, %v131
    %149 = vst.msk [vmem:[#allocation7 + $0x48] sm:$0xff] %vm139, %v132
    %150 = vst.msk [vmem:[#allocation7 + $0x50] sm:$0xff] %vm139, %v133
    %151 = vst.msk [vmem:[#allocation7 + $0x58] sm:$0xff] %vm139, %v134
    %152 = vst.msk [vmem:[#allocation7 + $0x60] sm:$0xff] %vm139, %v135
    %153 = vst.msk [vmem:[#allocation7 + $0x68] sm:$0xff] %vm139, %v136
    %154 = vst.msk [vmem:[#allocation7 + $0x70] sm:$0xff] %vm139, %v137
    %155 = vst.msk [vmem:[#allocation7 + $0x78] sm:$0xff] %vm139, %v138
    // Predicated region
    $region18: #{tpu_custom_call.1} parent=1 // pred_check
      _
    $region19: #{tpu_custom_call.1} parent=1 // pred_check_branch
      %157 = sbr.rel (0) target = $region21
    $region20: #{tpu_custom_call.1} parent=1 // pred_region
      %s159 = ssub.s32 2048, 2048
      %160 = vsyncadd [#allocation4], %s159
      %s161 = sshll.u32 [#allocation7], 4
      %s162 = int_to_ptr.vmem [resolvable:$true] %s161
      %167 = dma.vmem_to_hbm [thread:$0]  %s162, 2048, %s2, [#allocation4], 128, 128, 8
    $region21: #{tpu_custom_call.1} parent=1 // pred_fallthru
      _
    // Predicated region
    $region22: #{tpu_custom_call.1} parent=1 // pred_check
      _
    $region23: #{tpu_custom_call.1} parent=1 // pred_check_branch
      %169 = sbr.rel (0) target = $region25
    $region24: #{tpu_custom_call.1} parent=1 // pred_region
      %170 = dma.done [#allocation4], 2048
    $region25: #{tpu_custom_call.1} parent=1 // pred_fallthru
      _
    %171 = vsyncpa [#allocation3], 1
    %172 = vsyncpa [#allocation4], 1
    %173 = vsyncpa [#allocation5], 1

</llo_original>
